<compile_context>
chip_gen: v6e
topology: v6e:2x2x1
jax: 0.10.0
libtpu: 0.0.40
codegen_flags: <defaults>
</compile_context>

<pallas_src>
import functools
import math

import jax
import jax.numpy as jnp
from jax import lax
from jax.experimental import pallas as pl
from jax.experimental.pallas import tpu as pltpu


def _make_pe_table(max_len: int, d_model: int) -> jnp.ndarray:
    """Plain-JAX glue: (max_len, d_model) sinusoidal table, as in the PyTorch __init__."""
    position = jnp.arange(0, max_len, dtype=jnp.float32)[:, None]            # (L, 1)
    div_term = jnp.exp(
        jnp.arange(0, d_model, 2, dtype=jnp.float32) * (-math.log(10000.0) / d_model)
    )                                                                         # (D/2,)
    angles = position * div_term                                              # (L, D/2)
    pe = jnp.zeros((max_len, d_model), dtype=jnp.float32)
    pe = pe.at[:, 0::2].set(jnp.sin(angles))
    pe = pe.at[:, 1::2].set(jnp.cos(angles))
    return pe


def _pe_dropout_kernel(seed_ref, x_ref, pe_ref, o_ref, *, p, training):
    # x_ref:  (tS, B, D) if not batch_first else (B, tS, D)
    # pe_ref: (tS, 1, D) if not batch_first else (1, tS, D)  -> broadcasts over batch
    x = x_ref[...].astype(jnp.float32)
    pe = pe_ref[...].astype(jnp.float32)
    y = x + pe

    if training and p > 0.0:
        shape = y.shape
        block_elems = 1
        for d in shape:
            block_elems *= d

        # Global element index = tile offset + row-major index within the block.
        strides = pl.strides_from_shape(shape)
        flat = lax.broadcasted_iota(jnp.int32, shape, 0) * jnp.int32(strides[0])
        for dim in range(1, len(shape)):
            flat = flat + lax.broadcasted_iota(jnp.int32, shape, dim) * jnp.int32(strides[dim])
        idx = flat + pl.program_id(0) * jnp.int32(block_elems)

        # Stateless hash PRNG (murmur3 finalizer), seed mixed in.  Portable:
        # no TPU-specific PRNG primitive, identical results in interpret mode.
        h = idx ^ (seed_ref[0] * jnp.int32(-1640531527))        # 0x9E3779B9
        h = h ^ lax.shift_right_logical(h, 16)
        h = h * jnp.int32(-2048144789)                          # 0x85EBCA6B
        h = h ^ lax.shift_right_logical(h, 13)
        h = h * jnp.int32(-1028477387)                          # 0xC2B2AE35
        h = h ^ lax.shift_right_logical(h, 16)

        # Integer threshold compare on the low 24 bits; fold 1/(1-p) into select.
        r24 = h & jnp.int32(0x00FFFFFF)
        thresh = jnp.int32(int(p * float(1 << 24)))
        keep = r24 >= thresh
        y = y * jnp.where(keep, jnp.float32(1.0 / (1.0 - p)), jnp.float32(0.0))

    o_ref[...] = y.astype(o_ref.dtype)


def _padded_block_bytes(block_shape, itemsize):
    """Rough VMEM footprint of a 3-D block after (8,128) tiling of last two dims."""
    a, b, c = block_shape
    return a * (-(-b // 8) * 8) * (-(-c // 128) * 128) * itemsize


def positional_encoding_forward(
    x: jnp.ndarray,
    pe_table: jnp.ndarray,
    *,
    p: float = 0.1,
    batch_first: bool = False,
    training: bool = True,
    seed: int = 0,
) -> jnp.ndarray:
    """Pallas implementation of PositionalEncoding.forward."""
    if batch_first:
        B, S, D = x.shape
    else:
        S, B, D = x.shape
    pe_slice = pe_table[:S].astype(x.dtype)                     # (S, D), keep HBM dtype narrow
    itemsize = x.dtype.itemsize

    # Seq-axis tile: biggest tile <= ~2 MiB of x, so (x + out) double-buffering
    # stays well under scoped VMEM on v5e/v6e and v7x (64 MiB physical).
    target_block_bytes = 2 * 1024 * 1024
    bytes_per_step = max(1, B * D * itemsize)
    t_s = max(1, min(S, target_block_bytes // bytes_per_step))
    if t_s < S:
        t_s = max(8, (t_s // 8) * 8)                            # sublane-aligned tiles
    grid = (pl.cdiv(S, t_s),)

    if batch_first:
        pe_in = pe_slice[None, :, :]                            # (1, S, D)
        x_block, pe_block = (B, t_s, D), (1, t_s, D)
        x_map = lambda i, seed_ref: (0, i, 0)
        pe_map = lambda i, seed_ref: (0, i, 0)
    else:
        pe_in = pe_slice[:, None, :]                            # (S, 1, D)
        x_block, pe_block = (t_s, B, D), (t_s, 1, D)
        x_map = lambda i, seed_ref: (i, 0, 0)
        pe_map = lambda i, seed_ref: (i, 0, 0)

    x_spec = pl.BlockSpec(x_block, x_map)
    pe_spec = pl.BlockSpec(pe_block, pe_map)
    out_spec = pl.BlockSpec(x_block, x_map)

    # Explicit scoped-VMEM budget: double-buffered x-in, out, pe blocks + headroom.
    vmem_need = 2 * (2 * _padded_block_bytes(x_block, itemsize)
                     + _padded_block_bytes(pe_block, itemsize))
    vmem_limit = int(min(max(vmem_need + 4 * 1024 * 1024, 16 * 1024 * 1024),
                         64 * 1024 * 1024))

    seed_arr = jnp.asarray([seed], dtype=jnp.int32)
    kernel = functools.partial(_pe_dropout_kernel, p=float(p), training=bool(training))

    return pl.pallas_call(
        kernel,
        out_shape=jax.ShapeDtypeStruct(x.shape, x.dtype),
        grid_spec=pltpu.PrefetchScalarGridSpec(
            num_scalar_prefetch=1,                              # seed lives in SMEM
            grid=grid,
            in_specs=[x_spec, pe_spec],
            out_specs=out_spec,
        ),
        compiler_params=pltpu.CompilerParams(
            dimension_semantics=("parallel",),                  # shard grid across v7x's 2 TCs
            vmem_limit_bytes=vmem_limit,
        ),
    )(seed_arr, x, pe_in)


if __name__ == "__main__":
    # Module config consistent with the forward: d_model=32, max_len=500
    d_model = 32
    max_len = 500
    p = 0.1

    seq_len, batch = 8, 2
    key = jax.random.PRNGKey(0)
    # batch_first=False -> x is (seq_len, batch, d_model)
    x = jax.random.normal(key, (seq_len, batch, d_model), dtype=jnp.float32)
    pe_table = _make_pe_table(max_len, d_model)

    # --- batch_first=False, eval mode (dropout = identity): exact check ---
    out_eval = positional_encoding_forward(
        x, pe_table, p=p, batch_first=False, training=False)
    out_eval = jax.block_until_ready(out_eval)
    expected = x + pe_table[:seq_len][:, None, :]
    assert out_eval.shape == x.shape
    assert jnp.allclose(out_eval, expected, atol=1e-5, rtol=1e-5)

    # --- batch_first=False, train mode (in-kernel dropout) ---
    out_train = positional_encoding_forward(
        x, pe_table, p=p, batch_first=False, training=True, seed=1234)
    out_train = jax.block_until_ready(out_train)
    assert out_train.shape == x.shape
    scale = 1.0 / (1.0 - p)
    kept = out_train != 0.0
    # kept elements are scaled copies of the eval output; dropped elements are 0
    assert jnp.allclose(jnp.where(kept, out_train - expected * scale, 0.0),
                        jnp.zeros_like(out_train), atol=1e-4)
    drop_frac = float(1.0 - jnp.mean(kept.astype(jnp.float32)))
    assert 0.0 < drop_frac < 0.5

    # --- batch_first=True path, eval mode ---
    x_bf = jnp.transpose(x, (1, 0, 2))                          # (batch, seq, d_model)
    out_bf = positional_encoding_forward(
        x_bf, pe_table, p=p, batch_first=True, training=False)
    out_bf = jax.block_until_ready(out_bf)
    expected_bf = x_bf + pe_table[:seq_len][None, :, :]
    assert jnp.allclose(out_bf, expected_bf, atol=1e-5, rtol=1e-5)

    print("KERNEL_OK")
</pallas_src>

<mosaic_0001>
module attributes {stable_mosaic.version = 11 : i64} {
  func.func @_pe_dropout_kernel(%arg0: i32, %arg1: memref<1xi32, #tpu.memory_space<smem>>, %arg2: memref<8x2x32xf32, #tpu.memory_space<vmem>>, %arg3: memref<8x1x32xf32, #tpu.memory_space<vmem>>, %arg4: memref<8x2x32xf32, #tpu.memory_space<vmem>>) attributes {dimension_semantics = [#tpu.dimension_semantics<parallel>], iteration_bounds = array<i64: 1>, scalar_prefetch = 1 : i64, scratch_operands = 0 : i64, tpu.core_type = #tpu.core_type<tc>, window_params = [{transform_indices = @transform_0, window_bounds = array<i64: 8, 2, 32>}, {transform_indices = @transform_1, window_bounds = array<i64: 8, 1, 32>}, {transform_indices = @transform_2, window_bounds = array<i64: 8, 2, 32>}]} {
    %c0 = arith.constant 0 : index
    %c0_0 = arith.constant 0 : index
    %c0_1 = arith.constant 0 : index
    %0 = vector.load %arg2[%c0, %c0_0, %c0_1] : memref<8x2x32xf32, #tpu.memory_space<vmem>>, vector<8x2x32xf32>
    %c0_2 = arith.constant 0 : index
    %c0_3 = arith.constant 0 : index
    %c0_4 = arith.constant 0 : index
    %1 = vector.load %arg3[%c0_2, %c0_3, %c0_4] : memref<8x1x32xf32, #tpu.memory_space<vmem>>, vector<8x1x32xf32>
    %2 = vector.broadcast %1 : vector<8x1x32xf32> to vector<8x2x32xf32>
    %3 = arith.addf %0, %2 : vector<8x2x32xf32>
    %c0_5 = arith.constant 0 : index
    %c0_6 = arith.constant 0 : index
    %c0_7 = arith.constant 0 : index
    %4 = vector.load %arg4[%c0_5, %c0_6, %c0_7] : memref<8x2x32xf32, #tpu.memory_space<vmem>>, vector<8x2x32xf32>
    tpu.vector_store %arg4[%c0_5, %c0_6, %c0_7], %3 {strides = array<i32>} : memref<8x2x32xf32, #tpu.memory_space<vmem>>, vector<8x2x32xf32>,
    return
  }
  func.func @transform_0(%arg0: i32, %arg1: memref<1xi32, #tpu.memory_space<smem>>) -> (i32, i32, i32) {
    %c0_i32 = arith.constant 0 : i32
    %c0_i32_0 = arith.constant 0 : i32
    %c0_i32_1 = arith.constant 0 : i32
    return %arg0, %c0_i32, %c0_i32_0 : i32, i32, i32
  }
  func.func @transform_1(%arg0: i32, %arg1: memref<1xi32, #tpu.memory_space<smem>>) -> (i32, i32, i32) {
    %c0_i32 = arith.constant 0 : i32
    %c0_i32_0 = arith.constant 0 : i32
    %c0_i32_1 = arith.constant 0 : i32
    return %arg0, %c0_i32, %c0_i32_0 : i32, i32, i32
  }
  func.func @transform_2(%arg0: i32, %arg1: memref<1xi32, #tpu.memory_space<smem>>) -> (i32, i32, i32) {
    %c0_i32 = arith.constant 0 : i32
    %c0_i32_0 = arith.constant 0 : i32
    %c0_i32_1 = arith.constant 0 : i32
    return %arg0, %c0_i32, %c0_i32_0 : i32, i32, i32
  }
}

</mosaic_0001>

<llo_original>
// kernel: tpu_custom_call.1
$region0: #{tpu_custom_call.1}
  #allocation0 [shape = 'u32[]', space=smem, size = 0x4, offset = 0x4, fixed_abs, tag = 'smem constant byte address 0x4 - core index']
  #allocation1 [shape = 'u32[144,128]{1,0:T(1,128)}', space=vmem, size = 0x12000, scoped, tag = 'internal scratch']
  #allocation2 [shape = 's32[1]{0}', space=sflag, size = 0x4, scoped, tag = 'scoped memory for tpu_custom_call.1']
  #allocation3 [shape = 's32[1]{0:T(128)S(6)}', space=smem, size = 0x200, scoped, tag = 'prefetched SMEM operand 0']
  %s0 = inlined_call_operand.<no memory space> [shape: s32[1], index: 0, kind: input, shape index: {}]
  %s1 = inlined_call_operand.hbm [shape: f32[8,2,32], index: 1, kind: input, shape index: {}]
  %s2 = inlined_call_operand.hbm [shape: f32[8,1,32], index: 2, kind: input, shape index: {}]
  %s3 = inlined_call_operand.hbm [shape: f32[8,2,32], index: 3, kind: output, shape index: {}]
  %s4 = sld [smem:[#allocation0]]
  $region26: #{tpu_custom_call.1} parent=0
    _
  %s6 = ssub.s32 1, %s4
  %s7 = scalar_select 0, %s6, %s4
  %8 = sst [smem:[#allocation3]] %s0
  $region1: #{tpu_custom_call.1} parent=0
    #allocation4 [shape = 'u8[8192]{0}', space=vmem, size = 0x2000, scoped, tag = 'input window, operand 1, single buffered']
    #allocation5 [shape = 's32[1]{0}', space=sflag, size = 0x4, scoped, tag = 'scoped memory for tpu_custom_call.1']
    #allocation6 [shape = 's32[1]{0}', space=sflag, size = 0x4, scoped, tag = 'scoped memory for tpu_custom_call.1']
    #allocation7 [shape = 'u8[4096]{0}', space=vmem, size = 0x1000, scoped, tag = 'input window, operand 2, single buffered']
    #allocation8 [shape = 's32[1]{0}', space=sflag, size = 0x4, scoped, tag = 'scoped memory for tpu_custom_call.1']
    #allocation9 [shape = 'u8[8192]{0}', space=vmem, size = 0x2000, scoped, tag = 'output window, operand 0, single buffered']
    %9 = vsyncpa [#allocation5], 0
    %10 = vsyncpa [#allocation8], 0
    %11 = vsyncpa [#allocation6], 0
    // Predicated region
    $region2: #{tpu_custom_call.1} parent=1 // pred_check
      _
    $region3: #{tpu_custom_call.1} parent=1 // pred_check_branch
      %13 = sbr.rel (0) target = $region5
    $region4: #{tpu_custom_call.1} parent=1 // pred_region
      %s15 = ssub.s32 256, 256
      %16 = vsyncadd [#allocation5], %s15
      %s17 = sshll.u32 [#allocation4], 4
      %s18 = int_to_ptr.vmem [resolvable:$true] %s17
      %23 = dma.hbm_to_vmem [thread:$0]  %s1, 256, %s18, [#allocation5], 32, 32, 2
    $region5: #{tpu_custom_call.1} parent=1 // pred_fallthru
      _
    // Predicated region
    $region6: #{tpu_custom_call.1} parent=1 // pred_check
      _
    $region7: #{tpu_custom_call.1} parent=1 // pred_check_branch
      %25 = sbr.rel (0) target = $region9
    $region8: #{tpu_custom_call.1} parent=1 // pred_region
      %s27 = ssub.s32 128, 128
      %28 = vsyncadd [#allocation8], %s27
      %s29 = sshll.u32 [#allocation7], 4
      %s30 = int_to_ptr.vmem [resolvable:$true] %s29
      %35 = dma.hbm_to_vmem [thread:$0]  %s2, 128, %s30, [#allocation8], 16, 16, 1
    $region9: #{tpu_custom_call.1} parent=1 // pred_fallthru
      _
    // Predicated region
    $region10: #{tpu_custom_call.1} parent=1 // pred_check
      _
    $region11: #{tpu_custom_call.1} parent=1 // pred_check_branch
      %37 = sbr.rel (0) target = $region13
    $region12: #{tpu_custom_call.1} parent=1 // pred_region
      %38 = dma.done [#allocation5], 256
    $region13: #{tpu_custom_call.1} parent=1 // pred_fallthru
      _
    // Predicated region
    $region14: #{tpu_custom_call.1} parent=1 // pred_check
      _
    $region15: #{tpu_custom_call.1} parent=1 // pred_check_branch
      %40 = sbr.rel (0) target = $region17
    $region16: #{tpu_custom_call.1} parent=1 // pred_region
      %41 = dma.done [#allocation8], 128
    $region17: #{tpu_custom_call.1} parent=1 // pred_fallthru
      _
    %v42 = vld [vmem:[#allocation4] sm:$0x3]
    %v43 = vld [vmem:[#allocation4 + $0x2] sm:$0x3]
    %v44 = vld [vmem:[#allocation4 + $0x4] sm:$0x3]
    %v45 = vld [vmem:[#allocation4 + $0x6] sm:$0x3]
    %v46 = vld [vmem:[#allocation4 + $0x8] sm:$0x3]
    %v47 = vld [vmem:[#allocation4 + $0xa] sm:$0x3]
    %v48 = vld [vmem:[#allocation4 + $0xc] sm:$0x3]
    %v49 = vld [vmem:[#allocation4 + $0xe] sm:$0x3]
    %v50 = vld [vmem:[#allocation7] sm:$0x1]
    %v51 = vld [vmem:[#allocation7 + $0x1] sm:$0x1]
    %v52 = vld [vmem:[#allocation7 + $0x2] sm:$0x1]
    %v53 = vld [vmem:[#allocation7 + $0x3] sm:$0x1]
    %v54 = vld [vmem:[#allocation7 + $0x4] sm:$0x1]
    %v55 = vld [vmem:[#allocation7 + $0x5] sm:$0x1]
    %v56 = vld [vmem:[#allocation7 + $0x6] sm:$0x1]
    %v57 = vld [vmem:[#allocation7 + $0x7] sm:$0x1]
    %v66 = vlaneseq
    %v67 = vshrl.u32 %v66, 7
    %v68 = vsub.s32 0, %v67
    %v69 = vrot.slane %v50, %v68
    %v70 = vlaneseq
    %v71 = vshrl.u32 %v70, 7
    %v72 = vsub.s32 0, %v71
    %v73 = vrot.slane %v51, %v72
    %v74 = vlaneseq
    %v75 = vshrl.u32 %v74, 7
    %v76 = vsub.s32 0, %v75
    %v77 = vrot.slane %v52, %v76
    %v78 = vlaneseq
    %v79 = vshrl.u32 %v78, 7
    %v80 = vsub.s32 0, %v79
    %v81 = vrot.slane %v53, %v80
    %v82 = vlaneseq
    %v83 = vshrl.u32 %v82, 7
    %v84 = vsub.s32 0, %v83
    %v85 = vrot.slane %v54, %v84
    %v86 = vlaneseq
    %v87 = vshrl.u32 %v86, 7
    %v88 = vsub.s32 0, %v87
    %v89 = vrot.slane %v55, %v88
    %v90 = vlaneseq
    %v91 = vshrl.u32 %v90, 7
    %v92 = vsub.s32 0, %v91
    %v93 = vrot.slane %v56, %v92
    %v94 = vlaneseq
    %v95 = vshrl.u32 %v94, 7
    %v96 = vsub.s32 0, %v95
    %v97 = vrot.slane %v57, %v96
    %v106 = vadd.f32 %v42, %v69
    %v107 = vadd.f32 %v43, %v73
    %v108 = vadd.f32 %v44, %v77
    %v109 = vadd.f32 %v45, %v81
    %v110 = vadd.f32 %v46, %v85
    %v111 = vadd.f32 %v47, %v89
    %v112 = vadd.f32 %v48, %v93
    %v113 = vadd.f32 %v49, %v97
    %vm114 = vcmask 254976
    %115 = vst.msk [vmem:[#allocation9] sm:$0x3] %vm114, %v106
    %116 = vst.msk [vmem:[#allocation9 + $0x2] sm:$0x3] %vm114, %v107
    %117 = vst.msk [vmem:[#allocation9 + $0x4] sm:$0x3] %vm114, %v108
    %118 = vst.msk [vmem:[#allocation9 + $0x6] sm:$0x3] %vm114, %v109
    %119 = vst.msk [vmem:[#allocation9 + $0x8] sm:$0x3] %vm114, %v110
    %120 = vst.msk [vmem:[#allocation9 + $0xa] sm:$0x3] %vm114, %v111
    %121 = vst.msk [vmem:[#allocation9 + $0xc] sm:$0x3] %vm114, %v112
    %122 = vst.msk [vmem:[#allocation9 + $0xe] sm:$0x3] %vm114, %v113
    // Predicated region
    $region18: #{tpu_custom_call.1} parent=1 // pred_check
      _
    $region19: #{tpu_custom_call.1} parent=1 // pred_check_branch
      %124 = sbr.rel (0) target = $region21
    $region20: #{tpu_custom_call.1} parent=1 // pred_region
      %s126 = ssub.s32 256, 256
      %127 = vsyncadd [#allocation6], %s126
      %s128 = sshll.u32 [#allocation9], 4
      %s129 = int_to_ptr.vmem [resolvable:$true] %s128
      %134 = dma.vmem_to_hbm [thread:$0]  %s129, 256, %s3, [#allocation6], 32, 32, 2
    $region21: #{tpu_custom_call.1} parent=1 // pred_fallthru
      _
    // Predicated region
    $region22: #{tpu_custom_call.1} parent=1 // pred_check
      _
    $region23: #{tpu_custom_call.1} parent=1 // pred_check_branch
      %136 = sbr.rel (0) target = $region25
    $region24: #{tpu_custom_call.1} parent=1 // pred_region
      %137 = dma.done [#allocation6], 256
    $region25: #{tpu_custom_call.1} parent=1 // pred_fallthru
      _
    %138 = vsyncpa [#allocation5], 1
    %139 = vsyncpa [#allocation8], 1
    %140 = vsyncpa [#allocation6], 1

</llo_original>
